<compile_context>
chip_gen: v7x
topology: tpu7x:2x2x1
jax: 0.10.0
libtpu: 0.0.40
codegen_flags: <defaults>
</compile_context>

<pallas_src>
import jax
import jax.numpy as jnp
from jax.experimental import pallas as pl
from jax.experimental.pallas import tpu as pltpu


def _round_up(x, m):
    return ((x + m - 1) // m) * m


def _cdiv(a, b):
    return (a + b - 1) // b


# ----------------------------------------------------------------------------
# Kernel 1: fused embedding linear (bias-free)
#   y = one_hot(type_ids, T) @ W_type + feat @ W_feat
#   type_ids: [M,1] i32, feat: [M,Kf] bf16, W_type: [T,H] bf16, W_feat: [Kf,H] bf16
#   y: [M,H] bf16 (f32 MXU accumulation).
# ----------------------------------------------------------------------------
def _embed_linear_kernel(ids_ref, feat_ref, wt_ref, wf_ref, o_ref):
    tm = o_ref.shape[0]
    T = wt_ref.shape[0]
    type_iota = jax.lax.broadcasted_iota(jnp.int32, (tm, T), 1)
    onehot = (type_iota == ids_ref[...]).astype(wt_ref.dtype)         # exact {0,1}
    acc = jnp.dot(onehot, wt_ref[...], preferred_element_type=jnp.float32)
    if feat_ref.shape[1] == 1:
        # Single dense feature column (edge linear): VPU AXPY instead of a K=1 MXU dot.
        acc = acc + feat_ref[...].astype(jnp.float32) * wf_ref[...].astype(jnp.float32)
    else:
        acc = acc + jnp.dot(feat_ref[...], wf_ref[...],
                            preferred_element_type=jnp.float32)
    o_ref[...] = acc.astype(o_ref.dtype)


def embed_linear(type_ids, feat, w_type, w_feat, *, out_dtype=jnp.bfloat16, max_tm=4096):
    """Fused one_hot(type_ids) | feat -> linear, row-tiled; bf16 out by default."""
    M = type_ids.shape[0]
    T, H = w_type.shape
    Kf = feat.shape[1]
    assert w_feat.shape == (Kf, H)
    ids2 = type_ids.reshape(M, 1).astype(jnp.int32)

    # Large row tiles amortize the ~0.35us/step overhead, but keep >= 2 grid steps so
    # both v7x TensorCores get work. 16-row granularity keeps bf16 (16,128) tiling happy.
    tm = min(max_tm, _round_up(max(_cdiv(M, 2), 1), 16), _round_up(M, 16))
    grid = (_cdiv(M, tm),)

    out_itemsize = jnp.dtype(out_dtype).itemsize
    cost = pl.CostEstimate(
        flops=2 * M * (T + Kf) * H,
        transcendentals=0,
        bytes_accessed=int(M * (4 + Kf * feat.dtype.itemsize)
                           + (T + Kf) * H * w_type.dtype.itemsize
                           + M * H * out_itemsize),
    )
    return pl.pallas_call(
        _embed_linear_kernel,
        out_shape=jax.ShapeDtypeStruct((M, H), out_dtype),
        grid=grid,
        in_specs=[
            pl.BlockSpec((tm, 1), lambda i: (i, 0)),     # type ids for this row tile
            pl.BlockSpec((tm, Kf), lambda i: (i, 0)),    # dense features
            pl.BlockSpec((T, H), lambda i: (0, 0)),      # constant block -> fetched once
            pl.BlockSpec((Kf, H), lambda i: (0, 0)),     # constant block -> fetched once
        ],
        out_specs=pl.BlockSpec((tm, H), lambda i: (i, 0)),
        compiler_params=pltpu.CompilerParams(
            dimension_semantics=("parallel",),
            vmem_limit_bytes=32 * 1024 * 1024,
        ),
        cost_estimate=cost,
    )(ids2, feat, w_type, w_feat)


# ----------------------------------------------------------------------------
# Kernel 2: edge displacement  d[e] = pos[dst[e]] - pos[src[e]]
#   Edges tiled on the 128-lane axis; whole position table [N, 3] resident in VMEM.
#   The gather is an exact masked reduction (one-hot(dst) - one-hot(src), built once
#   per tile) reduced over the sublane (node) axis; output stored lane-dense as [3, E].
# ----------------------------------------------------------------------------
def _edge_disp_kernel(src_ref, dst_ref, pos_ref, dT_ref):
    # src_ref/dst_ref: [1, te] i32 ; pos_ref: [N, 3] f32 ; dT_ref: [3, te] f32
    n = pos_ref.shape[0]
    te = dT_ref.shape[1]
    node_ids = jax.lax.broadcasted_iota(jnp.int32, (n, te), 0)          # node id on sublanes
    sel = ((node_ids == dst_ref[...]).astype(jnp.float32)
           - (node_ids == src_ref[...]).astype(jnp.float32))            # exactly {-1,0,+1}
    # Products are +pos, -pos, or 0, so the reduction is bit-exact vs pos[dst]-pos[src].
    for c in range(3):
        col = pos_ref[:, c:c + 1]                                       # [n, 1]
        dT_ref[c:c + 1, :] = jnp.sum(sel * col, axis=0, keepdims=True)  # lane-dense store


def edge_displacement(init_pos, src, dst, *, max_te=2048):
    """init_pos: [N, 3] f32, src/dst: [E] int -> d: [E, 3] f32."""
    N, three = init_pos.shape
    assert three == 3
    E = src.shape[0]
    src2 = src.reshape(1, E).astype(jnp.int32)
    dst2 = dst.reshape(1, E).astype(jnp.int32)

    # Lane-dense edge tiles (multiple of 128, or the full E when E <= 128); bound the
    # [N, te] selection intermediates to a few MiB and aim for >= 2 grid steps (v7x).
    if E <= 128:
        te = E
    else:
        te_cap = max(128, ((4 << 20) // max(N * 4, 1)) // 128 * 128)
        te = min(max_te, te_cap, _round_up(_cdiv(E, 2), 128))
    grid = (_cdiv(E, te),)

    cost = pl.CostEstimate(
        flops=9 * E * N,  # compares / selects / multiply-adds per edge-node pair
        transcendentals=0,
        bytes_accessed=int(2 * E * 4 + N * 3 * 4 + E * 3 * 4),
    )
    dT = pl.pallas_call(
        _edge_disp_kernel,
        out_shape=jax.ShapeDtypeStruct((3, E), init_pos.dtype),
        grid=grid,
        in_specs=[
            pl.BlockSpec((1, te), lambda i: (0, i)),    # src ids (edges on lanes)
            pl.BlockSpec((1, te), lambda i: (0, i)),    # dst ids (edges on lanes)
            pl.BlockSpec((N, 3), lambda i: (0, 0)),     # whole position table, resident
        ],
        out_specs=pl.BlockSpec((3, te), lambda i: (0, i)),
        compiler_params=pltpu.CompilerParams(
            dimension_semantics=("parallel",),
            vmem_limit_bytes=32 * 1024 * 1024,
        ),
        cost_estimate=cost,
    )(src2, dst2, init_pos)
    return dT.T                                         # [E, 3]


# ----------------------------------------------------------------------------
# PosNet3D (synthetic, deterministic params)
# ----------------------------------------------------------------------------
class PosNet3DPallas:
    def __init__(self, key, *, hidden_dim, node_type_dim, n_node_feats,
                 edge_type_dim, model_type="egnn"):
        self.refine_net_type = model_type
        self.hidden_dim = hidden_dim
        self.node_type_dim = node_type_dim
        self.edge_type_dim = edge_type_dim
        self.node_feat_dim = node_type_dim + n_node_feats
        self.edge_feat_dim = edge_type_dim + 1

        node_out = hidden_dim  # no 'mix' energy_h_mode -> single-width node emb
        k1, k2 = jax.random.split(key)
        # torch nn.Linear default init: U(-1/sqrt(in), 1/sqrt(in)); stored as [in, out].
        # Weights kept in bf16: these layers are HBM-bandwidth-bound on v5e/v6e/v7x.
        nb = 1.0 / jnp.sqrt(jnp.float32(self.node_feat_dim))
        eb = 1.0 / jnp.sqrt(jnp.float32(self.edge_feat_dim))
        w_node = jax.random.uniform(k1, (self.node_feat_dim, node_out),
                                    jnp.float32, -nb, nb).astype(jnp.bfloat16)
        w_edge = jax.random.uniform(k2, (self.edge_feat_dim, hidden_dim),
                                    jnp.float32, -eb, eb).astype(jnp.bfloat16)
        # Split along the input axis: first type_dim rows are selected by the in-kernel
        # one-hot, remaining rows multiply the dense feature columns.
        self.w_node_type = w_node[:node_type_dim]
        self.w_node_feat = w_node[node_type_dim:]
        self.w_edge_type = w_edge[:edge_type_dim]
        self.w_edge_feat = w_edge[edge_type_dim:]

    def forward(self, node_type, node_feat, edge_type, edge_feat, edge_index, init_pos):
        bf16 = jnp.bfloat16
        # node_attr = cat([one_hot(node_type), node_feat], -1) @ W_node   (fused kernel)
        node_attr = embed_linear(node_type, node_feat.astype(bf16),
                                 self.w_node_type, self.w_node_feat)      # [N, H] bf16
        # edge_attr = cat([one_hot(edge_type), edge_feat], -1) @ W_edge   (fused kernel)
        edge_attr = embed_linear(edge_type, edge_feat.astype(bf16),
                                 self.w_edge_type, self.w_edge_feat)      # [E, H] bf16
        src, dst = edge_index[0], edge_index[1]
        d = edge_displacement(init_pos, src, dst)                         # [E, 3] f32

        g_data = {
            "x": init_pos,               # G.ndata['x']
            "f": node_attr[..., None],   # G.ndata['f'] : [N, hidden, 1]
            "w": edge_attr,              # G.edata['w'] : [E, hidden]
            "d": d,                      # G.edata['d'] : [E, 3]
        }
        # TODO(synk): refine_net (EGNN / SE3Transformer / UniTransformer) not translated;
        # positions pass through unchanged.
        final_pos = init_pos
        all_pos = [init_pos]
        return (final_pos, all_pos), g_data


if __name__ == "__main__":
    key = jax.random.PRNGKey(0)
    k_param, k_nt, k_nf, k_et, k_ef, k_pos, k_src, k_dst = jax.random.split(key, 8)

    # Small synthetic graph; sizes chosen so every kernel has >= 2 grid steps.
    N, E = 64, 256
    node_type_dim, n_node_feats = 16, 8
    edge_type_dim = 5
    hidden_dim = 128   # multiple of 128 -> lane-dense (unmasked) output stores

    node_type = jax.random.randint(k_nt, (N,), 0, node_type_dim, dtype=jnp.int32)
    node_feat = jax.random.normal(k_nf, (N, n_node_feats), dtype=jnp.float32)
    edge_type = jax.random.randint(k_et, (E,), 0, edge_type_dim, dtype=jnp.int32)
    edge_feat = jax.random.normal(k_ef, (E, 1), dtype=jnp.float32)
    init_pos = jax.random.normal(k_pos, (N, 3), dtype=jnp.float32)
    src = jax.random.randint(k_src, (E,), 0, N, dtype=jnp.int32)
    dst = jax.random.randint(k_dst, (E,), 0, N, dtype=jnp.int32)
    edge_index = jnp.stack([src, dst])

    model = PosNet3DPallas(
        k_param,
        hidden_dim=hidden_dim,
        node_type_dim=node_type_dim,
        n_node_feats=n_node_feats,
        edge_type_dim=edge_type_dim,
        model_type="egnn",
    )

    (final_pos, all_pos), g_data = model.forward(
        node_type, node_feat, edge_type, edge_feat, edge_index, init_pos
    )
    jax.block_until_ready((final_pos, g_data["f"], g_data["w"], g_data["d"]))

    # Correctness vs. plain-JAX reference built from the same bf16 weights / inputs.
    f32 = jnp.float32
    w_node = jnp.concatenate([model.w_node_type, model.w_node_feat], 0).astype(f32)
    w_edge = jnp.concatenate([model.w_edge_type, model.w_edge_feat], 0).astype(f32)
    node_in = jnp.concatenate(
        [jax.nn.one_hot(node_type, node_type_dim, dtype=f32),
         node_feat.astype(jnp.bfloat16).astype(f32)], -1)
    edge_in = jnp.concatenate(
        [jax.nn.one_hot(edge_type, edge_type_dim, dtype=f32),
         edge_feat.astype(jnp.bfloat16).astype(f32)], -1)
    ref_f = (node_in @ w_node)[..., None]
    ref_w = edge_in @ w_edge
    ref_d = init_pos[dst] - init_pos[src]

    # Embedding outputs are bf16 (perf) -> bf16-level tolerance; displacement is exact.
    assert jnp.allclose(g_data["f"].astype(f32), ref_f, atol=2e-2, rtol=2e-2)
    assert jnp.allclose(g_data["w"].astype(f32), ref_w, atol=2e-2, rtol=2e-2)
    assert jnp.allclose(g_data["d"], ref_d, atol=1e-6)
    assert jnp.allclose(final_pos, init_pos)

    print("KERNEL_OK")
</pallas_src>

<mosaic_0001>
module attributes {stable_mosaic.version = 11 : i64} {
  func.func @_embed_linear_kernel(%arg0: i32, %arg1: memref<32x1xi32, #tpu.memory_space<vmem>>, %arg2: memref<32x8xbf16, #tpu.memory_space<vmem>>, %arg3: memref<16x128xbf16, #tpu.memory_space<vmem>>, %arg4: memref<8x128xbf16, #tpu.memory_space<vmem>>, %arg5: memref<32x128xbf16, #tpu.memory_space<vmem>>) attributes {dimension_semantics = [#tpu.dimension_semantics<parallel>], iteration_bounds = array<i64: 2>, scalar_prefetch = 0 : i64, scratch_operands = 0 : i64, tpu.core_type = #tpu.core_type<tc>, window_params = [{transform_indices = @transform_0, window_bounds = array<i64: 32, 1>}, {transform_indices = @transform_1, window_bounds = array<i64: 32, 8>}, {pipeline_mode = #tpu.pipeline_mode<synchronous>, transform_indices = @transform_2, window_bounds = array<i64: 16, 128>}, {pipeline_mode = #tpu.pipeline_mode<synchronous>, transform_indices = @transform_3, window_bounds = array<i64: 8, 128>}, {transform_indices = @transform_4, window_bounds = array<i64: 32, 128>}]} {
    %0 = tpu.iota {dimensions = array<i32: 1>} : vector<32x16xi32>
    %c0 = arith.constant 0 : index
    %c0_0 = arith.constant 0 : index
    %1 = vector.load %arg1[%c0, %c0_0] : memref<32x1xi32, #tpu.memory_space<vmem>>, vector<32x1xi32>
    %2 = vector.broadcast %1 : vector<32x1xi32> to vector<32x16xi32>
    %3 = arith.cmpi eq, %0, %2 : vector<32x16xi32>
    %4 = arith.extui %3 : vector<32x16xi1> to vector<32x16xi32>
    %5 = arith.sitofp %4 : vector<32x16xi32> to vector<32x16xf32>
    %6 = arith.truncf %5 : vector<32x16xf32> to vector<32x16xbf16>
    %c0_1 = arith.constant 0 : index
    %c0_2 = arith.constant 0 : index
    %7 = vector.load %arg3[%c0_1, %c0_2] : memref<16x128xbf16, #tpu.memory_space<vmem>>, vector<16x128xbf16>
    %cst = arith.constant dense<0.000000e+00> : vector<32x128xf32>
    %8 = tpu.matmul %6, %7, %cst {dimension_numbers = #tpu.dot_dimension_numbers<[1], [0], [0], [1], [0, 0, 1, 1], [], []>} : vector<32x16xbf16>, vector<16x128xbf16>, vector<32x128xf32> -> vector<32x128xf32>
    %c0_3 = arith.constant 0 : index
    %c0_4 = arith.constant 0 : index
    %9 = vector.load %arg2[%c0_3, %c0_4] : memref<32x8xbf16, #tpu.memory_space<vmem>>, vector<32x8xbf16>
    %c0_5 = arith.constant 0 : index
    %c0_6 = arith.constant 0 : index
    %10 = vector.load %arg4[%c0_5, %c0_6] : memref<8x128xbf16, #tpu.memory_space<vmem>>, vector<8x128xbf16>
    %cst_7 = arith.constant dense<0.000000e+00> : vector<32x128xf32>
    %11 = tpu.matmul %9, %10, %cst_7 {dimension_numbers = #tpu.dot_dimension_numbers<[1], [0], [0], [1], [0, 0, 1, 1], [], []>} : vector<32x8xbf16>, vector<8x128xbf16>, vector<32x128xf32> -> vector<32x128xf32>
    %12 = arith.addf %8, %11 : vector<32x128xf32>
    %13 = arith.truncf %12 : vector<32x128xf32> to vector<32x128xbf16>
    %c0_8 = arith.constant 0 : index
    %c0_9 = arith.constant 0 : index
    %14 = vector.load %arg5[%c0_8, %c0_9] : memref<32x128xbf16, #tpu.memory_space<vmem>>, vector<32x128xbf16>
    tpu.vector_store %arg5[%c0_8, %c0_9], %13 {strides = array<i32>} : memref<32x128xbf16, #tpu.memory_space<vmem>>, vector<32x128xbf16>,
    return
  }
  func.func @transform_0(%arg0: i32) -> (i32, i32) {
    %c0_i32 = arith.constant 0 : i32
    %c0_i32_0 = arith.constant 0 : i32
    return %arg0, %c0_i32 : i32, i32
  }
  func.func @transform_1(%arg0: i32) -> (i32, i32) {
    %c0_i32 = arith.constant 0 : i32
    %c0_i32_0 = arith.constant 0 : i32
    return %arg0, %c0_i32 : i32, i32
  }
  func.func @transform_2(%arg0: i32) -> (i32, i32) {
    %c0_i32 = arith.constant 0 : i32
    %c0_i32_0 = arith.constant 0 : i32
    %c0_i32_1 = arith.constant 0 : i32
    return %c0_i32, %c0_i32_0 : i32, i32
  }
  func.func @transform_3(%arg0: i32) -> (i32, i32) {
    %c0_i32 = arith.constant 0 : i32
    %c0_i32_0 = arith.constant 0 : i32
    %c0_i32_1 = arith.constant 0 : i32
    return %c0_i32, %c0_i32_0 : i32, i32
  }
  func.func @transform_4(%arg0: i32) -> (i32, i32) {
    %c0_i32 = arith.constant 0 : i32
    %c0_i32_0 = arith.constant 0 : i32
    return %arg0, %c0_i32 : i32, i32
  }
}

</mosaic_0001>

<llo_original>
// kernel: tpu_custom_call.1
$region0: #{tpu_custom_call.1}
  #allocation0 [shape = 'u32[]', space=smem, size = 0x4, offset = 0x4, fixed_abs, tag = 'smem constant byte address 0x4 - core index']
  #allocation1 [shape = 'u32[144,128]{1,0:T(1,128)}', space=vmem, size = 0x12000, scoped, tag = 'internal scratch']
  %s0 = inlined_call_operand.vmem [shape: s32[64,1], index: 0, kind: input, shape index: {}]
  %s1 = inlined_call_operand.vmem [shape: bf16[64,8], index: 1, kind: input, shape index: {}]
  %s2 = inlined_call_operand.vmem [shape: bf16[16,128], index: 2, kind: input, shape index: {}]
  %s3 = inlined_call_operand.vmem [shape: bf16[8,128], index: 3, kind: input, shape index: {}]
  %s4 = inlined_call_operand.hbm [shape: bf16[64,128], index: 4, kind: output, shape index: {}]
  %s5 = sld [smem:[#allocation0]]
  $region49: #{tpu_custom_call.1} parent=0
    _
  %s7 = ssub.s32 1, %s5
  %s8 = scalar_select 0, %s7, %s5
  $region1: #{tpu_custom_call.1} parent=0
    #allocation2 [shape = 'u8[16384]{0}', space=vmem, size = 0x4000, scoped, tag = 'output window, operand 0']
    #allocation3 [shape = 's32[2]{0}', space=sflag, size = 0x8, scoped, tag = 'scoped memory for tpu_custom_call.1']
    %9 = vsyncpa [#allocation3], 0
    %s10 = scalar_lea.sflag [#allocation3], 1
    %11 = vsyncpa %s10, 0
    loop: start=0, step=1, limit=4
    $region2: #{tpu_custom_call.1} parent=1 // loop_pre_header
      _
    $region3: #{tpu_custom_call.1} parent=1 // loop_header
      %s13 = sphi 0, %s17
      %p14 = scmp.ge.s32.totalorder %s13, 4
      %s23 = sphi 0, %s25
      %s26 = sphi 0, %s23
      %s27 = sphi 0, %s26
      %s43 = sphi 0, %s27
      %s49 = sphi 0, %s51
      %s52 = sphi 0, %s49
      %s53 = sphi 0, %s52
      %s69 = sphi 0, %s53
      %s73 = sphi 0, %s73
      %s75 = sphi 0, %s73
      %s76 = sphi 0, %s75
      %s90 = sphi 0, %s76
      %s94 = sphi 0, %s94
      %s96 = sphi 0, %s94
      %s97 = sphi 0, %s96
      %s111 = sphi 0, %s97
      %s117 = sphi 0, %s119
      %s120 = sphi 0, %s117
      %s121 = sphi 0, %s120
      %s137 = sphi 0, %s121
    $region4: #{tpu_custom_call.1} parent=1 // loop_header_branch
      %16 = sbr.rel (%p14) target = $region8
    $region5: #{tpu_custom_call.1} parent=1 // loop_body
      %s18 = ssub.s32 %s13, 1
      %s19 = ssub.s32 %s13, 2
      %s20 = sadd.s32 %s13, 1
      %s21 = ssub.s32 %s13, %s20
      %p22 = scmp.eq.s32.totalorder %s21, 0
      %s24 = sadd.s32 %s23, 1
      %s25 = scalar_select %p22, %s23, %s24
      %p28 = pneg %p22
      %p29 = scmp.eq.s32.totalorder %s13, 1
      %p30 = por %p28, %p29
      %p31 = scmp.ne.s32.totalorder %s23, %s26
      %p32 = scmp.eq.s32.totalorder %s13, 0
      %p33 = por %p31, %p32
      %p34 = scmp.ne.s32.totalorder %s23, %s26
      %p35 = scmp.eq.s32.totalorder %s18, 1
      %p36 = por %p34, %p35
      %p37 = scmp.ne.s32.totalorder %s26, %s27
      %p38 = scmp.eq.s32.totalorder %s18, 0
      %p39 = por %p37, %p38
      %p40 = scmp.ne.s32.totalorder %s26, %s27
      %p41 = scmp.eq.s32.totalorder %s19, 1
      %p42 = por %p40, %p41
      %p44 = scmp.ne.s32.totalorder %s27, %s43
      %p45 = scmp.eq.s32.totalorder %s19, 0
      %p46 = por %p44, %p45
      %s47 = ssub.s32 %s13, %s20
      %p48 = scmp.eq.s32.totalorder %s47, 0
      %s50 = sadd.s32 %s49, 1
      %s51 = scalar_select %p48, %s49, %s50
      %p54 = pneg %p48
      %p55 = scmp.eq.s32.totalorder %s13, 1
      %p56 = por %p54, %p55
      %p57 = scmp.ne.s32.totalorder %s49, %s52
      %p58 = scmp.eq.s32.totalorder %s13, 0
      %p59 = por %p57, %p58
      %p60 = scmp.ne.s32.totalorder %s49, %s52
      %p61 = scmp.eq.s32.totalorder %s18, 1
      %p62 = por %p60, %p61
      %p63 = scmp.ne.s32.totalorder %s52, %s53
      %p64 = scmp.eq.s32.totalorder %s18, 0
      %p65 = por %p63, %p64
      %p66 = scmp.ne.s32.totalorder %s52, %s53
      %p67 = scmp.eq.s32.totalorder %s19, 1
      %p68 = por %p66, %p67
      %p70 = scmp.ne.s32.totalorder %s53, %s69
      %p71 = scmp.eq.s32.totalorder %s19, 0
      %p72 = por %p70, %p71
      %s74 = sadd.s32 %s73, 1
      %p77 = scmp.eq.s32.totalorder %s13, 1
      %p78 = scmp.ne.s32.totalorder %s73, %s75
      %p79 = scmp.eq.s32.totalorder %s13, 0
      %p80 = por %p78, %p79
      %p81 = scmp.ne.s32.totalorder %s73, %s75
      %p82 = scmp.eq.s32.totalorder %s18, 1
      %p83 = por %p81, %p82
      %p84 = scmp.ne.s32.totalorder %s75, %s76
      %p85 = scmp.eq.s32.totalorder %s18, 0
      %p86 = por %p84, %p85
      %p87 = scmp.ne.s32.totalorder %s75, %s76
      %p88 = scmp.eq.s32.totalorder %s19, 1
      %p89 = por %p87, %p88
      %p91 = scmp.ne.s32.totalorder %s76, %s90
      %p92 = scmp.eq.s32.totalorder %s19, 0
      %p93 = por %p91, %p92
      %s95 = sadd.s32 %s94, 1
      %p98 = scmp.eq.s32.totalorder %s13, 1
      %p99 = scmp.ne.s32.totalorder %s94, %s96
      %p100 = scmp.eq.s32.totalorder %s13, 0
      %p101 = por %p99, %p100
      %p102 = scmp.ne.s32.totalorder %s94, %s96
      %p103 = scmp.eq.s32.totalorder %s18, 1
      %p104 = por %p102, %p103
      %p105 = scmp.ne.s32.totalorder %s96, %s97
      %p106 = scmp.eq.s32.totalorder %s18, 0
      %p107 = por %p105, %p106
      %p108 = scmp.ne.s32.totalorder %s96, %s97
      %p109 = scmp.eq.s32.totalorder %s19, 1
      %p110 = por %p108, %p109
      %p112 = scmp.ne.s32.totalorder %s97, %s111
      %p113 = scmp.eq.s32.totalorder %s19, 0
      %p114 = por %p112, %p113
      %s115 = ssub.s32 %s13, %s20
      %p116 = scmp.eq.s32.totalorder %s115, 0
      %s118 = sadd.s32 %s117, 1
      %s119 = scalar_select %p116, %s117, %s118
      %p122 = pneg %p116
      %p123 = scmp.eq.s32.totalorder %s13, 1
      %p124 = por %p122, %p123
      %p125 = scmp.ne.s32.totalorder %s117, %s120
      %p126 = scmp.eq.s32.totalorder %s13, 0
      %p127 = por %p125, %p126
      %p128 = scmp.ne.s32.totalorder %s117, %s120
      %p129 = scmp.eq.s32.totalorder %s18, 1
      %p130 = por %p128, %p129
      %p131 = scmp.ne.s32.totalorder %s120, %s121
      %p132 = scmp.eq.s32.totalorder %s18, 0
      %p133 = por %p131, %p132
      %p134 = scmp.ne.s32.totalorder %s120, %s121
      %p135 = scmp.eq.s32.totalorder %s19, 1
      %p136 = por %p134, %p135
      %p138 = scmp.ne.s32.totalorder %s121, %s137
      %p139 = scmp.eq.s32.totalorder %s19, 0
      %p140 = por %p138, %p139
      %p141 = scmp.le.s32.totalorder 1, %s13
      %p142 = scmp.lt.s32.totalorder %s13, 3
      %p143 = pnand %p141, %p142
      %p144 = pneg %p143
      // Predicated region
      $region9: #{tpu_custom_call.1} parent=5 // pred_check
        _
      $region10: #{tpu_custom_call.1} parent=5 // pred_check_branch
        %146 = sbr.rel (%p143) target = $region12
      $region11: #{tpu_custom_call.1} parent=5 // pred_region
        %s147 = ssub.s32 %s13, 1
        // Predicated region
        $region13: #{tpu_custom_call.1} parent=11 // pred_check
          %p148 = pneg %p86
        $region14: #{tpu_custom_call.1} parent=11 // pred_check_branch
          %150 = sbr.rel (%p148) target = $region16
        $region15: #{tpu_custom_call.1} parent=11 // pred_region
          _
        $region16: #{tpu_custom_call.1} parent=11 // pred_fallthru
          _
        // Predicated region
        $region17: #{tpu_custom_call.1} parent=11 // pred_check
          %p151 = pneg %p107
        $region18: #{tpu_custom_call.1} parent=11 // pred_check_branch
          %153 = sbr.rel (%p151) target = $region20
        $region19: #{tpu_custom_call.1} parent=11 // pred_region
          _
        $region20: #{tpu_custom_call.1} parent=11 // pred_fallthru
          _
      $region12: #{tpu_custom_call.1} parent=5 // pred_fallthru
        _
      %p154 = scmp.lt.s32.totalorder %s13, 2
      // Predicated region
      $region21: #{tpu_custom_call.1} parent=5 // pred_check
        %p155 = pneg %p154
      $region22: #{tpu_custom_call.1} parent=5 // pred_check_branch
        %157 = sbr.rel (%p155) target = $region24
      $region23: #{tpu_custom_call.1} parent=5 // pred_region
        // Predicated region
        $region25: #{tpu_custom_call.1} parent=23 // pred_check
          %p158 = pneg %p33
        $region26: #{tpu_custom_call.1} parent=23 // pred_check_branch
          %160 = sbr.rel (%p158) target = $region28
        $region27: #{tpu_custom_call.1} parent=23 // pred_region
          %s161 = smul.u32 4, %s13
          %p162 = scmp.lt.s32.totalorder %s161, 7
          %s163 = scalar_select %p162, %s161, 7
          %s164 = smul.addr %s163, 8
          %s165 = scalar_lea.vmem %s0, %s164
          %s166 = smul.u32 4, %s13
        $region28: #{tpu_custom_call.1} parent=23 // pred_fallthru
          _
        // Predicated region
        $region29: #{tpu_custom_call.1} parent=23 // pred_check
          %p167 = pneg %p59
        $region30: #{tpu_custom_call.1} parent=23 // pred_check_branch
          %169 = sbr.rel (%p167) target = $region32
        $region31: #{tpu_custom_call.1} parent=23 // pred_region
          %s170 = smul.u32 4, %s13
          %p171 = scmp.lt.s32.totalorder %s170, 7
          %s172 = scalar_select %p171, %s170, 7
          %s173 = smul.addr %s172, 4
          %s174 = scalar_lea.vmem %s1, %s173
          %s175 = smul.u32 4, %s13
        $region32: #{tpu_custom_call.1} parent=23 // pred_fallthru
          _
      $region24: #{tpu_custom_call.1} parent=5 // pred_fallthru
        _
      %p176 = scmp.le.s32.totalorder 1, %s13
      %p177 = scmp.lt.s32.totalorder %s13, 3
      %p178 = pnand %p176, %p177
      %p179 = pneg %p178
      // Predicated region
      $region33: #{tpu_custom_call.1} parent=5 // pred_check
        _
      $region34: #{tpu_custom_call.1} parent=5 // pred_check_branch
        %181 = sbr.rel (%p178) target = $region36
      $region35: #{tpu_custom_call.1} parent=5 // pred_region
        %s182 = ssub.s32 %s13, 1
        %s183 = smul.u32 4, %s18
        %p184 = scmp.lt.s32.totalorder %s183, 7
        %s185 = scalar_select %p184, %s183, 7
        %s186 = smul.addr %s185, 8
        %s187 = scalar_lea.vmem %s0, %s186
        %p188 = pneg %p39
        %p189 = pneg %p36
        %s190 = smul.u32 4, %s18
        %p191 = scmp.lt.s32.totalorder %s190, 7
        %s192 = scalar_select %p191, %s190, 7
        %s193 = smul.addr %s192, 4
        %s194 = scalar_lea.vmem %s1, %s193
        %p195 = pneg %p65
        %p196 = pneg %p62
        %p197 = pneg %p86
        %p198 = pneg %p83
        %p199 = pneg %p107
        %p200 = pneg %p104
        %p201 = pneg %p133
        %p202 = pneg %p130
        %s203 = sand.u32 %s120, 1
        %s204 = scalar_lea.sflag [#allocation3], %s203
        %s205 = sand.u32 %s120, 1
        %s206 = smul.addr %s205, 16
        %s207 = scalar_lea.vmem [#allocation2], %s206
        %s208 = smul.u32 4, %s18
        %p209 = scmp.lt.s32.totalorder %s208, 7
        %s210 = scalar_select %p209, %s208, 7
        %s211 = smul.addr %s210, 8
        %s212 = scalar_lea.vmem %s0, %s211
        %s213 = smul.u32 4, %s18
        %s214 = smul.u32 4, %s18
        %p215 = scmp.lt.s32.totalorder %s214, 7
        %s216 = scalar_select %p215, %s214, 7
        %s217 = smul.addr %s216, 4
        %s218 = scalar_lea.vmem %s1, %s217
        %s219 = smul.u32 4, %s18
        %s220 = smul.u32 4, %s18
        %v222 = vlaneseq
        %v223 = vand.u32 %v222, 127
        %v224 = vld [vmem:[%s212] sm:$0xff]
        %v225 = vld [vmem:[%s212 + $0x8] sm:$0xff]
        %v226 = vld [vmem:[%s212 + $0x10] sm:$0xff]
        %v227 = vld [vmem:[%s212 + $0x18] sm:$0xff]
        %228 = vset.pattern.permute.xlu0 0
        %229 = vperm.xlu0 %228, %v224
        %v230 = vpop.permute.xlu0 %229
        %231 = vset.pattern.permute.xlu0 0
        %232 = vperm.xlu0 %231, %v225
        %v233 = vpop.permute.xlu0 %232
        %234 = vset.pattern.permute.xlu0 0
        %235 = vperm.xlu0 %234, %v226
        %v236 = vpop.permute.xlu0 %235
        %237 = vset.pattern.permute.xlu0 0
        %238 = vperm.xlu0 %237, %v227
        %v239 = vpop.permute.xlu0 %238
        %vm240 = vcmp.eq.s32.totalorder %v223, %v230
        %vm241 = vcmp.eq.s32.totalorder %v223, %v233
        %vm242 = vcmp.eq.s32.totalorder %v223, %v236
        %vm243 = vcmp.eq.s32.totalorder %v223, %v239
        %v244 = vsel %vm240, 1, 0
        %v245 = vsel %vm241, 1, 0
        %v246 = vsel %vm242, 1, 0
        %v247 = vsel %vm243, 1, 0
        %v248 = vcvt.s32.f32 %v244
        %v249 = vcvt.s32.f32 %v245
        %v250 = vcvt.s32.f32 %v246
        %v251 = vcvt.s32.f32 %v247
        %v252 = vpack.c.bf16 %v249, %v248
        %v253 = vpack.c.bf16 %v251, %v250
        %v254 = vld [vmem:[%s2] sm:$0xf]
        %v255 = vld [vmem:[%s2 + $0x4] sm:$0xf]
        %v256 = vld [vmem:[%s218] sm:$0xf]
        %v257 = vld [vmem:[%s218 + $0x4] sm:$0xf]
        %v258 = vld [vmem:[%s218 + $0x8] sm:$0xf]
        %v259 = vld [vmem:[%s218 + $0xc] sm:$0xf]
        %v260 = vld [vmem:[%s3] sm:$0xf]
        %v265 = vunpack.c.l.b16 %v256
        %v266 = vunpack.c.l.b16 %v257
        %v267 = vunpack.c.l.b16 %v258
        %v268 = vunpack.c.l.b16 %v259
        %v269 = vpack.c.b16 %v266, %v265
        %v270 = vpack.c.b16 %v268, %v267
        %vm271 = vcmask 64512
        %v273 = vsel %vm271, %v269, 0
        %v276 = vsel %vm271, %v270, 0
        %vm278 = vcmask 1043456
        %v280 = vsel %vm278, %v260, 0
        %282 = vmatprep.subr.bf16.mxu0 0
        %283 = vmatpush1.bf16.msra.mxu0 %v280
        %284 = vmatprep.subr.bf16.mxu0 0
        %285 = vmatpush1.bf16.msra.mxu0 0
        %286 = vmatprep.subr.bf16.mxu0 0
        %287 = vmatpush1.bf16.msra.mxu0 0
        %288 = vmatprep.subr.bf16.mxu0 0
        %289 = vmatpush1.bf16.msra.mxu0 0
        %290 = vmatprep.subr.bf16.mxu0 0
        %291 = vmatpush1.bf16.msra.mxu0 0
        %292 = vmatprep.subr.bf16.mxu0 0
        %293 = vmatpush1.bf16.msra.mxu0 0
        %294 = vmatprep.subr.bf16.mxu0 0
        %295 = vmatpush1.bf16.msra.mxu0 0
        %296 = vmatprep.subr.bf16.mxu0 0
        %297 = vmatpush1.bf16.msra.mxu0 0
        %298 = vmatprep.subr.bf16.mxu0 0
        %299 = vmatpush1.bf16.msra.mxu0 0
        %300 = vmatprep.subr.bf16.mxu0 0
        %301 = vmatpush1.bf16.msra.mxu0 0
        %302 = vmatprep.subr.bf16.mxu0 0
        %303 = vmatpush1.bf16.msra.mxu0 0
        %304 = vmatprep.subr.bf16.mxu0 0
        %305 = vmatpush1.bf16.msra.mxu0 0
        %306 = vmatprep.subr.bf16.mxu0 0
        %307 = vmatpush1.bf16.msra.mxu0 0
        %308 = vmatprep.subr.bf16.mxu0 0
        %309 = vmatpush1.bf16.msra.mxu0 0
        %310 = vmatprep.subr.bf16.mxu0 0
        %311 = vmatpush1.bf16.msra.mxu0 0
        %312 = vmatprep.subr.bf16.mxu0 0
        %313 = vmatpush1.bf16.msra.mxu0 0
        %314 = vmatprep.mubr.bf16.mxu0 0
        %315 = vmatmul.mubr.bf16.gmra.mrb[0].mxu0 %v273
        %v316 = vpop.f32.mrb[0].mxu0
        %v317 = vadd.f32 0.0, %v316
        %v318 = vpop.f32.mrb[0].mxu0
        %v319 = vpop.f32.mrb[0].mxu0
        %v320 = vadd.f32 0.0, %v319
        %v321 = vpop.f32.mrb[0].mxu0
        %322 = vmatprep.mubr.bf16.mxu0 0
        %323 = vmatmul.mubr.bf16.gmra.mrb[0].mxu0 %v276
        %v324 = vpop.f32.mrb[0].mxu0
        %v325 = vadd.f32 0.0, %v324
        %v326 = vpop.f32.mrb[0].mxu0
        %v327 = vpop.f32.mrb[0].mxu0
        %v328 = vadd.f32 0.0, %v327
        %v329 = vpop.f32.mrb[0].mxu0
        %330 = vdwg.mxu0
        %v333 = vunpack.c.l.b16 %v254
        %v334 = vunpack.c.l.b16 %v255
        %v335 = vpack.c.b16 %v334, %v333
        %vm337 = vcmask 130048
        %v339 = vsel %vm337, %v252, 0
        %v342 = vsel %vm337, %v253, 0
        %344 = vmatprep.subr.bf16.mxu0 0
        %345 = vmatpush1.bf16.msra.mxu0 %v335
        %346 = vmatprep.subr.bf16.mxu0 0
        %347 = vmatpush1.bf16.msra.mxu0 0
        %348 = vmatprep.subr.bf16.mxu0 0
        %349 = vmatpush1.bf16.msra.mxu0 0
        %350 = vmatprep.subr.bf16.mxu0 0
        %351 = vmatpush1.bf16.msra.mxu0 0
        %352 = vmatprep.subr.bf16.mxu0 0
        %353 = vmatpush1.bf16.msra.mxu0 0
        %354 = vmatprep.subr.bf16.mxu0 0
        %355 = vmatpush1.bf16.msra.mxu0 0
        %356 = vmatprep.subr.bf16.mxu0 0
        %357 = vmatpush1.bf16.msra.mxu0 0
        %358 = vmatprep.subr.bf16.mxu0 0
        %359 = vmatpush1.bf16.msra.mxu0 0
        %360 = vmatprep.subr.bf16.mxu0 0
        %361 = vmatpush1.bf16.msra.mxu0 0
        %362 = vmatprep.subr.bf16.mxu0 0
        %363 = vmatpush1.bf16.msra.mxu0 0
        %364 = vmatprep.subr.bf16.mxu0 0
        %365 = vmatpush1.bf16.msra.mxu0 0
        %366 = vmatprep.subr.bf16.mxu0 0
        %367 = vmatpush1.bf16.msra.mxu0 0
        %368 = vmatprep.subr.bf16.mxu0 0
        %369 = vmatpush1.bf16.msra.mxu0 0
        %370 = vmatprep.subr.bf16.mxu0 0
        %371 = vmatpush1.bf16.msra.mxu0 0
        %372 = vmatprep.subr.bf16.mxu0 0
        %373 = vmatpush1.bf16.msra.mxu0 0
        %374 = vmatprep.subr.bf16.mxu0 0
        %375 = vmatpush1.bf16.msra.mxu0 0
        %376 = vmatprep.mubr.bf16.mxu0 0
        %377 = vmatmul.mubr.bf16.gmra.mrb[0].mxu0 %v339
        %v378 = vpop.f32.mrb[0].mxu0
        %v379 = vadd.f32 %v317, %v378
        %v380 = vpop.f32.mrb[0].mxu0
        %v381 = vpop.f32.mrb[0].mxu0
        %v382 = vadd.f32 %v320, %v381
        %v383 = vpop.f32.mrb[0].mxu0
        %384 = vmatprep.mubr.bf16.mxu0 0
        %385 = vmatmul.mubr.bf16.gmra.mrb[0].mxu0 %v342
        %v386 = vpop.f32.mrb[0].mxu0
        %v387 = vadd.f32 %v325, %v386
        %v388 = vpop.f32.mrb[0].mxu0
        %v389 = vpop.f32.mrb[0].mxu0
        %v390 = vadd.f32 %v328, %v389
        %v391 = vpop.f32.mrb[0].mxu0
        %392 = vdwg.mxu0
        %v393 = vpack.c.bf16 %v382, %v379
        %v394 = vpack.c.bf16 %v390, %v387
        %v397 = vunpack.c.l.b16 %v393
        %v398 = vunpack.c.h.b16 %v393
        %v399 = vunpack.c.l.b16 %v394
        %v400 = vunpack.c.h.b16 %v394
        %v401 = vpack.c.b16 %v397, %v397
        %v402 = vpack.c.b16 %v398, %v398
        %v403 = vpack.c.b16 %v399, %v399
        %v404 = vpack.c.b16 %v400, %v400
        %409 = vst [vmem:[%s207] sm:$0xf] %v401
        %410 = vst [vmem:[%s207 + $0x4] sm:$0xf] %v402
        %411 = vst [vmem:[%s207 + $0x8] sm:$0xf] %v403
        %412 = vst [vmem:[%s207 + $0xc] sm:$0xf] %v404
        %s413 = sand.u32 %s120, 1
        %s414 = scalar_lea.sflag [#allocation3], %s413
        %s415 = sand.u32 %s120, 1
        %s416 = smul.addr %s415, 16
        %s417 = scalar_lea.vmem [#allocation2], %s416
        // Predicated region
        $region37: #{tpu_custom_call.1} parent=35 // pred_check
          %p418 = pneg %p130
        $region38: #{tpu_custom_call.1} parent=35 // pred_check_branch
          %420 = sbr.rel (%p418) target = $region40
        $region39: #{tpu_custom_call.1} parent=35 // pred_region
          %s421 = smul.u32 4, %s18
          %s423 = ssub.s32 256, 256
          %424 = vsyncadd %s414, %s423
          %s425 = smul.addr %s421, 64
          %s426 = scalar_lea.hbm %s4, %s425
          %s427 = sshll.u32 %s417, 4
          %s428 = int_to_ptr.vmem [resolvable:$true] %s427
          %433 = dma.vmem_to_hbm [thread:$0]  %s428, 256, %s426, %s414, 64, 64, 4
        $region40: #{tpu_custom_call.1} parent=35 // pred_fallthru
          _
      $region36: #{tpu_custom_call.1} parent=5 // pred_fallthru
        _
      %p434 = scmp.le.s32.totalorder 2, %s13
      // Predicated region
      $region41: #{tpu_custom_call.1} parent=5 // pred_check
        %p435 = pneg %p434
      $region42: #{tpu_custom_call.1} parent=5 // pred_check_branch
        %437 = sbr.rel (%p435) target = $region44
      $region43: #{tpu_custom_call.1} parent=5 // pred_region
        %s438 = ssub.s32 %s13, 2
        // Predicated region
        $region45: #{tpu_custom_call.1} parent=43 // pred_check
          %p439 = pneg %p136
        $region46: #{tpu_custom_call.1} parent=43 // pred_check_branch
          %441 = sbr.rel (%p439) target = $region48
        $region47: #{tpu_custom_call.1} parent=43 // pred_region
          %s442 = sand.u32 %s121, 1
          %s443 = scalar_lea.sflag [#allocation3], %s442
          %s444 = sand.u32 %s121, 1
          %s445 = smul.addr %s444, 16
          %s446 = scalar_lea.vmem [#allocation2], %s445
          %447 = dma.done %s443, 256
        $region48: #{tpu_custom_call.1} parent=43 // pred_fallthru
          _
      $region44: #{tpu_custom_call.1} parent=5 // pred_fallthru
        _
    $region6: #{tpu_custom_call.1} parent=1 // loop_footer
      %s17 = sadd.s32 1, %s13
    $region7: #{tpu_custom_call.1} parent=1 // loop_footer_branch
      %12 = sbr.rel target = $region3
    $region8: #{tpu_custom_call.1} parent=1 // loop_exit
      _
    %448 = vsyncpa [#allocation3], 1
    %s449 = scalar_lea.sflag [#allocation3], 1
    %450 = vsyncpa %s449, 1

</llo_original>
